<compile_context>
chip_gen: v7x
topology: tpu7x:2x2x1
jax: 0.10.0
libtpu: 0.0.40
codegen_flags: <defaults>
</compile_context>

<pallas_src>
import functools

import jax
import jax.numpy as jnp
from jax.experimental import pallas as pl
from jax.experimental.pallas import tpu as pltpu

TM = 256                       # output-tile rows (full extent when M <= TM)
TN = 256                       # output-tile cols (128 when Np is not a 256 multiple)
VMEM_LIMIT = 32 * 1024 * 1024  # explicit scoped-VMEM cap, safe on v5e/v6e/v7x


def _round_up(x, m):
    return (x + m - 1) // m * m


# ----------------------------------------------------------------------------
# Pallas kernel: branch-stacked tiled matmul, fused bias/residual/activation
# ----------------------------------------------------------------------------
def _mm_kernel(*refs, activation, fuse_res):
    if fuse_res:
        a_ref, w_ref, bias_ref, res_ref, o_ref = refs
    else:
        a_ref, w_ref, bias_ref, o_ref = refs
        res_ref = None

    acc = jnp.dot(a_ref[...], w_ref[...], preferred_element_type=jnp.float32)
    r = acc + bias_ref[...]
    if res_ref is not None:
        r = r + res_ref[...].astype(jnp.float32)
    if activation == "relu":
        r = jnp.maximum(r, 0.0)
    elif activation == "sigmoid":
        r = pl.reciprocal(1.0 + jnp.exp(-r), approx=True)   # EUP recip
        r = jnp.clip(r, 0.0, 1.0)
    o_ref[...] = r.astype(o_ref.dtype)


@functools.partial(jax.jit, static_argnames=("activation", "out_dtype"))
def matmul_bias_act(a, w, bias, residual=None, *, activation="none",
                    out_dtype=jnp.bfloat16):
    """(B,M,K) @ pre-packed (B,Kp,Np) bf16 weight + bias, fused res/activation."""
    B, M, K = a.shape
    _, Kp, Np = w.shape

    if M <= TM:
        tm, Mp = M, M                      # full-extent block, no pad / slice
    else:
        tm = TM
        Mp = _round_up(M, TM)
    tn = TN if Np % TN == 0 else 128

    a_p = a.astype(jnp.bfloat16)
    if Mp != M or Kp != K:
        a_p = jnp.pad(a_p, ((0, 0), (0, Mp - M), (0, Kp - K)))

    operands = [a_p, w, bias]
    fuse_res = residual is not None
    if fuse_res:
        r_p = residual.astype(jnp.bfloat16)
        Nr = r_p.shape[-1]
        if Mp != M or Np != Nr:
            r_p = jnp.pad(r_p, ((0, 0), (0, Mp - M), (0, Np - Nr)))
        operands.append(r_p)

    Mi, Nj = Mp // tm, Np // tn
    if Mi > Nj:
        # more M tiles than N tiles: keep the weight resident, stream activation
        grid = (B, Nj, Mi)
        a_idx = lambda b, j, i: (b, i, 0)
        w_idx = lambda b, j, i: (b, 0, j)
        v_idx = lambda b, j, i: (b, 0, j)
        o_idx = lambda b, j, i: (b, i, j)
    else:
        grid = (B, Mi, Nj)
        a_idx = lambda b, i, j: (b, i, 0)
        w_idx = lambda b, i, j: (b, 0, j)
        v_idx = lambda b, i, j: (b, 0, j)
        o_idx = lambda b, i, j: (b, i, j)

    in_specs = [pl.BlockSpec((None, tm, Kp), a_idx),
                pl.BlockSpec((None, Kp, tn), w_idx),
                pl.BlockSpec((None, 1, tn), v_idx)]
    if fuse_res:
        in_specs.append(pl.BlockSpec((None, tm, tn), o_idx))

    out = pl.pallas_call(
        functools.partial(_mm_kernel, activation=activation, fuse_res=fuse_res),
        out_shape=jax.ShapeDtypeStruct((B, Mp, Np), out_dtype),
        grid_spec=pltpu.PrefetchScalarGridSpec(
            num_scalar_prefetch=0,
            grid=grid,
            in_specs=in_specs,
            out_specs=pl.BlockSpec((None, tm, tn), o_idx)),
        compiler_params=pltpu.CompilerParams(
            dimension_semantics=("parallel", "parallel", "parallel"),
            vmem_limit_bytes=VMEM_LIMIT),
    )(*operands)
    if Mp != M:
        out = out[:, :M, :]
    return out


# ----------------------------------------------------------------------------
# Pallas kernel: stride-1 pad-1 3x3 conv as an in-kernel 9-tap reduction
# ----------------------------------------------------------------------------
def _conv3x3_kernel(x_ref, w_ref, bias_ref, o_ref, *, wp, cin):
    # x_ref: (rows, cin) flattened padded image; each tap is a constant row shift.
    m_out = o_ref.shape[0]
    acc = None
    for t in range(9):
        i, j = divmod(t, 3)
        off = i * wp + j
        a = x_ref[off:off + m_out, :]
        part = jnp.dot(a, w_ref[t * cin:(t + 1) * cin, :],
                       preferred_element_type=jnp.float32)
        acc = part if acc is None else acc + part
    r = jnp.maximum(acc + bias_ref[...], 0.0)
    o_ref[...] = r.astype(o_ref.dtype)


@jax.jit
def conv3x3_s1_relu(x, w, bias):
    """Stride-1 / pad-1 3x3 conv (+BN-folded bias + ReLU) without im2col."""
    B, N, H, W, C = x.shape
    _, K9, Np = w.shape
    cin = K9 // 9
    assert C == cin, (C, cin)

    wp = W + 2
    # Spatial pad (top=1, bottom=2, left=1, right=1): the extra bottom row keeps
    # the shifted flat reads of the discarded right-edge rows in bounds.
    xp = jnp.pad(x.astype(jnp.bfloat16),
                 ((0, 0), (0, 0), (1, 2), (1, 1), (0, 0)))
    rows = (H + 3) * wp
    xflat = xp.reshape(B, N, rows, C)
    m_out = H * wp                        # valid rows are y*wp + x, x < W

    tn = TN if Np % TN == 0 else 128
    nj = Np // tn

    out = pl.pallas_call(
        functools.partial(_conv3x3_kernel, wp=wp, cin=cin),
        out_shape=jax.ShapeDtypeStruct((B, N, m_out, Np), jnp.bfloat16),
        grid_spec=pltpu.PrefetchScalarGridSpec(
            num_scalar_prefetch=0,
            grid=(B, nj, N),              # image index innermost: weight resident
            in_specs=[
                pl.BlockSpec((None, None, rows, C), lambda b, j, n: (b, n, 0, 0)),
                pl.BlockSpec((None, K9, tn), lambda b, j, n: (b, 0, j)),
                pl.BlockSpec((None, 1, tn), lambda b, j, n: (b, 0, j)),
            ],
            out_specs=pl.BlockSpec((None, None, m_out, tn),
                                   lambda b, j, n: (b, n, 0, j))),
        compiler_params=pltpu.CompilerParams(
            dimension_semantics=("parallel", "parallel", "parallel"),
            vmem_limit_bytes=VMEM_LIMIT),
    )(xflat, w, bias)
    # rows are y*wp + x; drop the (wp - W) garbage columns.
    return out.reshape(B, N, H, wp, Np)[:, :, :, :W, :]


# ----------------------------------------------------------------------------
# JAX glue: im2col (stem / stride-2 3x3 only), pooling
# ----------------------------------------------------------------------------
def _im2col(x, kh, kw, stride, pad):
    n, h, w, c = x.shape
    if pad:
        x = jnp.pad(x, ((0, 0), (pad, pad), (pad, pad), (0, 0)))
    ho = (h + 2 * pad - kh) // stride + 1
    wo = (w + 2 * pad - kw) // stride + 1
    cols = []
    for i in range(kh):
        for j in range(kw):
            cols.append(x[:, i:i + ho * stride:stride,
                          j:j + wo * stride:stride, :])
    patches = jnp.stack(cols, axis=3)                 # (n, ho, wo, kh*kw, c)
    return patches.reshape(n * ho * wo, kh * kw * c), ho, wo


def conv_bn_act(x, p, *, stride, pad, relu, residual=None):
    """Conv (BN folded) + optional (residual add +) ReLU, branch-stacked."""
    B, n, h, w, c = x.shape
    kh, kw = p["kh"], p["kw"]
    Np = p["w"].shape[-1]

    if kh == 3 and kw == 3 and stride == 1:
        return conv3x3_s1_relu(x, p["w"], p["b"])     # ReLU always fused here

    if kh == 1 and kw == 1:
        xs = x[:, :, ::stride, ::stride, :] if stride > 1 else x
        ho, wo = xs.shape[2], xs.shape[3]
        patches = xs.reshape(B, n * ho * wo, c)
    else:
        # TODO(synk): stem 7x7 and stride-2 3x3 convs keep explicit im2col.
        xm = x.reshape(B * n, h, w, c)
        p2d, ho, wo = _im2col(xm, kh, kw, stride, pad)
        patches = p2d.reshape(B, n * ho * wo, kh * kw * c)

    if residual is not None:
        res2d = residual.reshape(B, n * ho * wo, residual.shape[-1])
        act = "relu"                                  # relu(conv + bias + residual)
    else:
        res2d = None
        act = "relu" if relu else "none"

    out = matmul_bias_act(patches, p["w"], p["b"], res2d,
                          activation=act, out_dtype=jnp.bfloat16)
    return out.reshape(B, n, ho, wo, Np)


def maxpool_3x3_s2_p1(x):
    return jax.lax.reduce_window(
        x, jnp.array(-jnp.inf, x.dtype), jax.lax.max,
        window_dimensions=(1, 1, 3, 3, 1),
        window_strides=(1, 1, 2, 2, 1),
        padding=((0, 0), (0, 0), (1, 1), (1, 1), (0, 0)))


# ----------------------------------------------------------------------------
# Deterministic parameter construction (ResNet-50, BN folded, eval semantics).
# Weights are packed ONCE here: (K, N) layout, K/N padded to 128, bf16.
# ----------------------------------------------------------------------------
def _pack_matmul_weight(w_kn, bias_n):
    K, N = w_kn.shape
    Kp = _round_up(K, 128)
    Np = _round_up(max(N, 128), 128)
    w_p = jnp.pad(w_kn, ((0, Kp - K), (0, Np - N))).astype(jnp.bfloat16)
    b_p = jnp.pad(bias_n.reshape(1, -1).astype(jnp.float32),
                  ((0, 0), (0, Np - N)))
    return w_p, b_p


def _pack_conv3x3_weight(w_hwio, bias_n):
    # (3,3,I,O) -> per-tap channel padding so it matches padded carried channels.
    _, _, I, O = w_hwio.shape
    Ip = _round_up(I, 128)
    Np = _round_up(max(O, 128), 128)
    w_p = jnp.pad(w_hwio, ((0, 0), (0, 0), (0, Ip - I), (0, Np - O)))
    w_p = w_p.reshape(9 * Ip, Np).astype(jnp.bfloat16)
    b_p = jnp.pad(bias_n.reshape(1, -1).astype(jnp.float32),
                  ((0, 0), (0, Np - O)))
    return w_p, b_p


def init_conv_bn(key, out_c, in_c, kh, kw):
    k1, k2, k3 = jax.random.split(key, 3)
    fan_in = in_c * kh * kw
    w = jax.random.normal(k1, (out_c, in_c, kh, kw), jnp.float32) * (2.0 / fan_in) ** 0.5
    gamma = 1.0 + 0.1 * jax.random.normal(k2, (out_c,), jnp.float32)
    beta = 0.05 * jax.random.normal(k3, (out_c,), jnp.float32)
    run_mean = jnp.zeros((out_c,), jnp.float32)
    run_var = jnp.ones((out_c,), jnp.float32)
    eps = 1e-5
    scale = gamma / jnp.sqrt(run_var + eps)
    w_fold = w * scale[:, None, None, None]
    b_fold = beta - run_mean * scale
    w_hwio = jnp.transpose(w_fold, (2, 3, 1, 0))      # (kh, kw, I, O), tap-major
    if kh == 3 and kw == 3:
        w_p, b_p = _pack_conv3x3_weight(w_hwio, b_fold)
    else:
        w_p, b_p = _pack_matmul_weight(w_hwio.reshape(kh * kw * in_c, out_c), b_fold)
    return {"w": w_p, "b": b_p, "kh": kh, "kw": kw, "in_c": in_c, "out_c": out_c}


def init_linear(key, out_f, in_f):
    k1, k2 = jax.random.split(key)
    bound = 1.0 / (in_f ** 0.5)
    w = jax.random.uniform(k1, (out_f, in_f), jnp.float32, -bound, bound)
    b = jax.random.uniform(k2, (out_f,), jnp.float32, -bound, bound)
    w_p, b_p = _pack_matmul_weight(w.T, b)
    return {"w": w_p, "b": b_p, "out_f": out_f, "in_f": in_f}


def init_resnet50(key):
    params = {"conv1": init_conv_bn(jax.random.fold_in(key, 0), 64, 3, 7, 7)}
    stages = []
    in_c = 64
    cnt = 1
    for s, (planes, nblocks) in enumerate(zip((64, 128, 256, 512), (3, 4, 6, 3))):
        stage = []
        for b in range(nblocks):
            blk = {
                "conv1": init_conv_bn(jax.random.fold_in(key, cnt + 0), planes, in_c, 1, 1),
                "conv2": init_conv_bn(jax.random.fold_in(key, cnt + 1), planes, planes, 3, 3),
                "conv3": init_conv_bn(jax.random.fold_in(key, cnt + 2), planes * 4, planes, 1, 1),
            }
            cnt += 3
            if b == 0:
                blk["down"] = init_conv_bn(jax.random.fold_in(key, cnt), planes * 4, in_c, 1, 1)
                cnt += 1
            stage.append(blk)
            in_c = planes * 4
        stages.append(stage)
    params["stages"] = stages
    params["fc"] = init_linear(jax.random.fold_in(key, 10_000), 1000, 2048)
    return params


def _stack_branches(p1, p2):
    # model1/model2 are shape-identical; stack their arrays along a leading
    # branch axis so one pallas_call (branch grid axis, "parallel") serves both.
    return jax.tree_util.tree_map(
        lambda a, b: jnp.stack([a, b], axis=0) if isinstance(a, jax.Array) else a,
        p1, p2)


def init_resnet50_di(key, n_classes):
    k1, k2, k3 = jax.random.split(key, 3)
    trunk = _stack_branches(init_resnet50(k1), init_resnet50(k2))
    cls = init_linear(k3, n_classes, 2000)
    cls = {"w": cls["w"][None], "b": cls["b"][None],
           "out_f": n_classes, "in_f": 2000}
    return {"trunk": trunk, "cls": cls}


# ----------------------------------------------------------------------------
# Forward pass
# ----------------------------------------------------------------------------
def resnet50_trunk_forward(trunk, x):
    # x: (2, N, H, W, 3) bf16, branch-stacked
    x = conv_bn_act(x, trunk["conv1"], stride=2, pad=3, relu=True)
    x = maxpool_3x3_s2_p1(x)
    for s, stage in enumerate(trunk["stages"]):
        for b, blk in enumerate(stage):
            stride = 2 if (s > 0 and b == 0) else 1
            out = conv_bn_act(x, blk["conv1"], stride=1, pad=0, relu=True)
            out = conv_bn_act(out, blk["conv2"], stride=stride, pad=1, relu=True)
            if "down" in blk:
                ident = conv_bn_act(x, blk["down"], stride=stride, pad=0, relu=False)
            else:
                ident = x
            # conv3 with the residual add + ReLU fused into the matmul epilogue.
            x = conv_bn_act(out, blk["conv3"], stride=1, pad=0, relu=False,
                            residual=ident)
    feat = jnp.mean(x.astype(jnp.float32), axis=(2, 3)).astype(jnp.bfloat16)  # (2,N,2048)
    fc = trunk["fc"]
    return matmul_bias_act(feat, fc["w"], fc["b"], None, activation="none",
                           out_dtype=jnp.float32)                             # (2,N,1024)


def resnet50_di_forward(params, x1, x2):
    x = jnp.stack([x1, x2], axis=0)                         # (2, N, 3, H, W)
    x = jnp.transpose(x, (0, 1, 3, 4, 2)).astype(jnp.bfloat16)
    fc_out = resnet50_trunk_forward(params["trunk"], x)     # (2, N, 1024) f32
    n_feat = params["trunk"]["fc"]["out_f"]
    feats = jnp.concatenate([fc_out[0, :, :n_feat],
                             fc_out[1, :, :n_feat]], axis=-1)   # (N, 2000)
    cls = params["cls"]
    logits = matmul_bias_act(feats[None].astype(jnp.bfloat16), cls["w"], cls["b"],
                             None, activation="sigmoid",
                             out_dtype=jnp.float32)         # (1, N, 128)
    return logits[0, :, :cls["out_f"]]


# ----------------------------------------------------------------------------
if __name__ == "__main__":
    key = jax.random.PRNGKey(0)
    n_classes = 10
    pk, xk1, xk2 = jax.random.split(key, 3)
    params = init_resnet50_di(pk, n_classes)

    # Small-but-valid ResNet-50 inputs: batch=2, 3 channels, 32x32 spatial.
    x1 = jax.random.normal(xk1, (2, 3, 32, 32), jnp.float32)
    x2 = jax.random.normal(xk2, (2, 3, 32, 32), jnp.float32)

    out = resnet50_di_forward(params, x1, x2)
    out = jax.block_until_ready(out)

    assert out.shape == (2, n_classes), out.shape
    assert bool(jnp.all(jnp.isfinite(out)))
    assert bool(jnp.all((out >= 0.0) & (out <= 1.0)))
    print("KERNEL_OK")
</pallas_src>

<mosaic_0001>
module attributes {stable_mosaic.version = 11 : i64} {
  func.func @_mm_kernel(%arg0: i32, %arg1: i32, %arg2: i32, %arg3: memref<1x256x256xbf16, #tpu.memory_space<vmem>>, %arg4: memref<1x256x128xbf16, #tpu.memory_space<vmem>>, %arg5: memref<1x1x128xf32, #tpu.memory_space<vmem>>, %arg6: memref<1x256x128xbf16, #tpu.memory_space<vmem>>) attributes {dimension_semantics = [#tpu.dimension_semantics<parallel>, #tpu.dimension_semantics<parallel>, #tpu.dimension_semantics<parallel>], iteration_bounds = array<i64: 2, 1, 2>, scalar_prefetch = 0 : i64, scratch_operands = 0 : i64, tpu.core_type = #tpu.core_type<tc>, window_params = [{transform_indices = @transform_0, window_bounds = array<i64: 1, 256, 256>}, {transform_indices = @transform_1, window_bounds = array<i64: 1, 256, 128>}, {transform_indices = @transform_2, window_bounds = array<i64: 1, 1, 128>}, {transform_indices = @transform_3, window_bounds = array<i64: 1, 256, 128>}]} {
    %c0 = arith.constant 0 : index
    %c0_0 = arith.constant 0 : index
    %c0_1 = arith.constant 0 : index
    %0 = vector.load %arg3[%c0, %c0_0, %c0_1] : memref<1x256x256xbf16, #tpu.memory_space<vmem>>, vector<1x256x256xbf16>
    %1 = vector.shape_cast %0 : vector<1x256x256xbf16> to vector<256x256xbf16>
    %c0_2 = arith.constant 0 : index
    %c0_3 = arith.constant 0 : index
    %c0_4 = arith.constant 0 : index
    %2 = vector.load %arg4[%c0_2, %c0_3, %c0_4] : memref<1x256x128xbf16, #tpu.memory_space<vmem>>, vector<1x256x128xbf16>
    %3 = vector.shape_cast %2 : vector<1x256x128xbf16> to vector<256x128xbf16>
    %cst = arith.constant dense<0.000000e+00> : vector<256x128xf32>
    %4 = tpu.matmul %1, %3, %cst {dimension_numbers = #tpu.dot_dimension_numbers<[1], [0], [0], [1], [0, 0, 1, 1], [], []>} : vector<256x256xbf16>, vector<256x128xbf16>, vector<256x128xf32> -> vector<256x128xf32>
    %c0_5 = arith.constant 0 : index
    %c0_6 = arith.constant 0 : index
    %c0_7 = arith.constant 0 : index
    %5 = vector.load %arg5[%c0_5, %c0_6, %c0_7] : memref<1x1x128xf32, #tpu.memory_space<vmem>>, vector<1x1x128xf32>
    %6 = vector.shape_cast %5 : vector<1x1x128xf32> to vector<1x128xf32>
    %7 = vector.broadcast %6 : vector<1x128xf32> to vector<256x128xf32>
    %8 = arith.addf %4, %7 : vector<256x128xf32>
    %cst_8 = arith.constant 0.000000e+00 : f32
    %9 = vector.broadcast %cst_8 : f32 to vector<256x128xf32>
    %10 = arith.maximumf %8, %9 : vector<256x128xf32>
    %11 = arith.truncf %10 : vector<256x128xf32> to vector<256x128xbf16>
    %c0_9 = arith.constant 0 : index
    %c0_10 = arith.constant 0 : index
    %c0_11 = arith.constant 0 : index
    %12 = vector.load %arg6[%c0_9, %c0_10, %c0_11] : memref<1x256x128xbf16, #tpu.memory_space<vmem>>, vector<1x256x128xbf16>
    %13 = vector.shape_cast %12 : vector<1x256x128xbf16> to vector<256x128xbf16>
    %14 = vector.shape_cast %11 : vector<256x128xbf16> to vector<1x256x128xbf16>
    tpu.vector_store %arg6[%c0_9, %c0_10, %c0_11], %14 {strides = array<i32>} : memref<1x256x128xbf16, #tpu.memory_space<vmem>>, vector<1x256x128xbf16>,
    return
  }
  func.func @transform_0(%arg0: i32, %arg1: i32, %arg2: i32) -> (i32, i32, i32) {
    %c0_i32 = arith.constant 0 : i32
    %c0_i32_0 = arith.constant 0 : i32
    return %arg0, %arg2, %c0_i32 : i32, i32, i32
  }
  func.func @transform_1(%arg0: i32, %arg1: i32, %arg2: i32) -> (i32, i32, i32) {
    %c0_i32 = arith.constant 0 : i32
    %c0_i32_0 = arith.constant 0 : i32
    return %arg0, %c0_i32, %arg1 : i32, i32, i32
  }
  func.func @transform_2(%arg0: i32, %arg1: i32, %arg2: i32) -> (i32, i32, i32) {
    %c0_i32 = arith.constant 0 : i32
    %c0_i32_0 = arith.constant 0 : i32
    return %arg0, %c0_i32, %arg1 : i32, i32, i32
  }
  func.func @transform_3(%arg0: i32, %arg1: i32, %arg2: i32) -> (i32, i32, i32) {
    %c0_i32 = arith.constant 0 : i32
    return %arg0, %arg2, %arg1 : i32, i32, i32
  }
}

</mosaic_0001>

<llo_original>
// kernel: matmul_bias_act.1
$region0: #{matmul_bias_act.1}
  #allocation0 [shape = 'u32[]', space=smem, size = 0x4, offset = 0x4, fixed_abs, tag = 'smem constant byte address 0x4 - core index']
  #allocation1 [shape = 'u32[144,128]{1,0:T(1,128)}', space=vmem, size = 0x12000, scoped, tag = 'internal scratch']
  %s0 = inlined_call_operand.vmem [shape: bf16[2,512,256], index: 0, kind: input, shape index: {}]
  %s1 = inlined_call_operand.vmem [shape: bf16[2,256,128], index: 1, kind: input, shape index: {}]
  %s2 = inlined_call_operand.vmem [shape: f32[2,1,128], index: 2, kind: input, shape index: {}]
  %s3 = inlined_call_operand.hbm [shape: bf16[2,512,128], index: 3, kind: output, shape index: {}]
  %s4 = sld [smem:[#allocation0]]
  $region45: #{matmul_bias_act.1} parent=0
    _
  %s6 = ssub.s32 1, %s4
  %s7 = scalar_select 0, %s6, %s4
  $region1: #{matmul_bias_act.1} parent=0
    #allocation2 [shape = 'u8[131072]{0}', space=vmem, size = 0x20000, scoped, tag = 'output window, operand 0']
    #allocation3 [shape = 's32[2]{0}', space=sflag, size = 0x8, scoped, tag = 'scoped memory for matmul_bias_act.1']
    %8 = vsyncpa [#allocation3], 0
    %s9 = scalar_lea.sflag [#allocation3], 1
    %10 = vsyncpa %s9, 0
    loop: start=0, step=1, limit=6
    $region2: #{matmul_bias_act.1} parent=1 // loop_pre_header
      _
    $region3: #{matmul_bias_act.1} parent=1 // loop_header
      %s12 = sphi 0, %s16
      %p13 = scmp.ge.s32.totalorder %s12, 6
      %s19 = sphi 0, %s38
      %s20 = sphi 0, %s34
      %s21 = sphi 0, %s30
      %s22 = sphi 0, %s19
      %s23 = sphi 0, %s20
      %s24 = sphi 0, %s21
      %s25 = sphi 0, %s22
      %s26 = sphi 0, %s23
      %s27 = sphi 0, %s24
      %s43 = sphi 0, %s45
      %s46 = sphi 0, %s43
      %s47 = sphi 0, %s46
      %s63 = sphi 0, %s47
      %s71 = sphi 0, %s73
      %s74 = sphi 0, %s71
      %s75 = sphi 0, %s74
      %s91 = sphi 0, %s75
      %s99 = sphi 0, %s101
      %s102 = sphi 0, %s99
      %s103 = sphi 0, %s102
      %s119 = sphi 0, %s103
      %s129 = sphi 0, %s131
      %s132 = sphi 0, %s129
      %s133 = sphi 0, %s132
      %s149 = sphi 0, %s133
    $region4: #{matmul_bias_act.1} parent=1 // loop_header_branch
      %15 = sbr.rel (%p13) target = $region8
    $region5: #{matmul_bias_act.1} parent=1 // loop_body
      %s17 = ssub.s32 %s12, 1
      %s18 = ssub.s32 %s12, 2
      %s28 = sadd.s32 1, %s21
      %p29 = scmp.ge.s32.totalorder %s28, 2
      %s30 = scalar_select %p29, 0, %s28
      %s31 = sadd.s32 1, %s20
      %s32 = scalar_select %p29, %s31, %s20
      %p33 = scmp.ge.s32.totalorder %s32, 1
      %s34 = scalar_select %p33, 0, %s32
      %s35 = sadd.s32 1, %s19
      %s36 = scalar_select %p33, %s35, %s19
      %p37 = scmp.ge.s32.totalorder %s36, 2
      %s38 = scalar_select %p37, 0, %s36
      %s39 = ssub.s32 %s19, %s38
      %s40 = ssub.s32 %s21, %s30
      %s41 = sor.u32 %s39, %s40
      %p42 = scmp.eq.s32.totalorder %s41, 0
      %s44 = sadd.s32 %s43, 1
      %s45 = scalar_select %p42, %s43, %s44
      %p48 = pneg %p42
      %p49 = scmp.eq.s32.totalorder %s12, 3
      %p50 = por %p48, %p49
      %p51 = scmp.ne.s32.totalorder %s43, %s46
      %p52 = scmp.eq.s32.totalorder %s12, 0
      %p53 = por %p51, %p52
      %p54 = scmp.ne.s32.totalorder %s43, %s46
      %p55 = scmp.eq.s32.totalorder %s17, 3
      %p56 = por %p54, %p55
      %p57 = scmp.ne.s32.totalorder %s46, %s47
      %p58 = scmp.eq.s32.totalorder %s17, 0
      %p59 = por %p57, %p58
      %p60 = scmp.ne.s32.totalorder %s46, %s47
      %p61 = scmp.eq.s32.totalorder %s18, 3
      %p62 = por %p60, %p61
      %p64 = scmp.ne.s32.totalorder %s47, %s63
      %p65 = scmp.eq.s32.totalorder %s18, 0
      %p66 = por %p64, %p65
      %s67 = ssub.s32 %s19, %s38
      %s68 = ssub.s32 %s20, %s34
      %s69 = sor.u32 %s67, %s68
      %p70 = scmp.eq.s32.totalorder %s69, 0
      %s72 = sadd.s32 %s71, 1
      %s73 = scalar_select %p70, %s71, %s72
      %p76 = pneg %p70
      %p77 = scmp.eq.s32.totalorder %s12, 3
      %p78 = por %p76, %p77
      %p79 = scmp.ne.s32.totalorder %s71, %s74
      %p80 = scmp.eq.s32.totalorder %s12, 0
      %p81 = por %p79, %p80
      %p82 = scmp.ne.s32.totalorder %s71, %s74
      %p83 = scmp.eq.s32.totalorder %s17, 3
      %p84 = por %p82, %p83
      %p85 = scmp.ne.s32.totalorder %s74, %s75
      %p86 = scmp.eq.s32.totalorder %s17, 0
      %p87 = por %p85, %p86
      %p88 = scmp.ne.s32.totalorder %s74, %s75
      %p89 = scmp.eq.s32.totalorder %s18, 3
      %p90 = por %p88, %p89
      %p92 = scmp.ne.s32.totalorder %s75, %s91
      %p93 = scmp.eq.s32.totalorder %s18, 0
      %p94 = por %p92, %p93
      %s95 = ssub.s32 %s19, %s38
      %s96 = ssub.s32 %s20, %s34
      %s97 = sor.u32 %s95, %s96
      %p98 = scmp.eq.s32.totalorder %s97, 0
      %s100 = sadd.s32 %s99, 1
      %s101 = scalar_select %p98, %s99, %s100
      %p104 = pneg %p98
      %p105 = scmp.eq.s32.totalorder %s12, 3
      %p106 = por %p104, %p105
      %p107 = scmp.ne.s32.totalorder %s99, %s102
      %p108 = scmp.eq.s32.totalorder %s12, 0
      %p109 = por %p107, %p108
      %p110 = scmp.ne.s32.totalorder %s99, %s102
      %p111 = scmp.eq.s32.totalorder %s17, 3
      %p112 = por %p110, %p111
      %p113 = scmp.ne.s32.totalorder %s102, %s103
      %p114 = scmp.eq.s32.totalorder %s17, 0
      %p115 = por %p113, %p114
      %p116 = scmp.ne.s32.totalorder %s102, %s103
      %p117 = scmp.eq.s32.totalorder %s18, 3
      %p118 = por %p116, %p117
      %p120 = scmp.ne.s32.totalorder %s103, %s119
      %p121 = scmp.eq.s32.totalorder %s18, 0
      %p122 = por %p120, %p121
      %s123 = ssub.s32 %s19, %s38
      %s124 = ssub.s32 %s21, %s30
      %s125 = sor.u32 %s123, %s124
      %s126 = ssub.s32 %s20, %s34
      %s127 = sor.u32 %s125, %s126
      %p128 = scmp.eq.s32.totalorder %s127, 0
      %s130 = sadd.s32 %s129, 1
      %s131 = scalar_select %p128, %s129, %s130
      %p134 = pneg %p128
      %p135 = scmp.eq.s32.totalorder %s12, 3
      %p136 = por %p134, %p135
      %p137 = scmp.ne.s32.totalorder %s129, %s132
      %p138 = scmp.eq.s32.totalorder %s12, 0
      %p139 = por %p137, %p138
      %p140 = scmp.ne.s32.totalorder %s129, %s132
      %p141 = scmp.eq.s32.totalorder %s17, 3
      %p142 = por %p140, %p141
      %p143 = scmp.ne.s32.totalorder %s132, %s133
      %p144 = scmp.eq.s32.totalorder %s17, 0
      %p145 = por %p143, %p144
      %p146 = scmp.ne.s32.totalorder %s132, %s133
      %p147 = scmp.eq.s32.totalorder %s18, 3
      %p148 = por %p146, %p147
      %p150 = scmp.ne.s32.totalorder %s133, %s149
      %p151 = scmp.eq.s32.totalorder %s18, 0
      %p152 = por %p150, %p151
      %p153 = scmp.le.s32.totalorder 1, %s12
      %p154 = scmp.lt.s32.totalorder %s12, 5
      %p155 = pnand %p153, %p154
      %p156 = pneg %p155
      // Predicated region
      $region9: #{matmul_bias_act.1} parent=5 // pred_check
        _
      $region10: #{matmul_bias_act.1} parent=5 // pred_check_branch
        %158 = sbr.rel (%p155) target = $region12
      $region11: #{matmul_bias_act.1} parent=5 // pred_region
        %s159 = ssub.s32 %s12, 1
      $region12: #{matmul_bias_act.1} parent=5 // pred_fallthru
        _
      %p160 = scmp.lt.s32.totalorder %s12, 4
      // Predicated region
      $region13: #{matmul_bias_act.1} parent=5 // pred_check
        %p161 = pneg %p160
      $region14: #{matmul_bias_act.1} parent=5 // pred_check_branch
        %163 = sbr.rel (%p161) target = $region16
      $region15: #{matmul_bias_act.1} parent=5 // pred_region
        // Predicated region
        $region17: #{matmul_bias_act.1} parent=15 // pred_check
          %p164 = pneg %p53
        $region18: #{matmul_bias_act.1} parent=15 // pred_check_branch
          %166 = sbr.rel (%p164) target = $region20
        $region19: #{matmul_bias_act.1} parent=15 // pred_region
          %s167 = smul.u32 32, %s21
          %p168 = scmp.lt.s32.totalorder %s19, 1
          %s169 = scalar_select %p168, %s19, 1
          %p170 = scmp.lt.s32.totalorder %s167, 63
          %s171 = scalar_select %p170, %s167, 63
          %s172 = smul.addr %s171, 2
          %s173 = smul.addr %s169, 128
          %s174 = sadd.s32 %s172, %s173
          %s175 = smul.addr %s174, 4
          %s176 = scalar_lea.vmem %s0, %s175
          %s177 = smul.u32 32, %s21
        $region20: #{matmul_bias_act.1} parent=15 // pred_fallthru
          _
        // Predicated region
        $region21: #{matmul_bias_act.1} parent=15 // pred_check
          %p178 = pneg %p81
        $region22: #{matmul_bias_act.1} parent=15 // pred_check_branch
          %180 = sbr.rel (%p178) target = $region24
        $region23: #{matmul_bias_act.1} parent=15 // pred_region
          %p181 = scmp.lt.s32.totalorder %s19, 1
          %s182 = scalar_select %p181, %s19, 1
          %p183 = scmp.lt.s32.totalorder %s20, 0
          %s184 = scalar_select %p183, %s20, 0
          %s185 = smul.addr %s182, 32
          %s186 = sadd.s32 %s184, %s185
          %s187 = smul.addr %s186, 4
          %s188 = scalar_lea.vmem %s1, %s187
        $region24: #{matmul_bias_act.1} parent=15 // pred_fallthru
          _
        // Predicated region
        $region25: #{matmul_bias_act.1} parent=15 // pred_check
          %p189 = pneg %p109
        $region26: #{matmul_bias_act.1} parent=15 // pred_check_branch
          %191 = sbr.rel (%p189) target = $region28
        $region27: #{matmul_bias_act.1} parent=15 // pred_region
          %p192 = scmp.lt.s32.totalorder %s19, 1
          %s193 = scalar_select %p192, %s19, 1
          %p194 = scmp.lt.s32.totalorder %s20, 0
          %s195 = scalar_select %p194, %s20, 0
          %s196 = sadd.s32 %s195, %s193
          %s197 = scalar_lea.vmem %s2, %s196
        $region28: #{matmul_bias_act.1} parent=15 // pred_fallthru
          _
      $region16: #{matmul_bias_act.1} parent=5 // pred_fallthru
        _
      %p198 = scmp.le.s32.totalorder 1, %s12
      %p199 = scmp.lt.s32.totalorder %s12, 5
      %p200 = pnand %p198, %p199
      %p201 = pneg %p200
      // Predicated region
      $region29: #{matmul_bias_act.1} parent=5 // pred_check
        _
      $region30: #{matmul_bias_act.1} parent=5 // pred_check_branch
        %203 = sbr.rel (%p200) target = $region32
      $region31: #{matmul_bias_act.1} parent=5 // pred_region
        %s204 = ssub.s32 %s12, 1
        %s205 = smul.u32 32, %s24
        %p206 = scmp.lt.s32.totalorder %s22, 1
        %s207 = scalar_select %p206, %s22, 1
        %p208 = scmp.lt.s32.totalorder %s205, 63
        %s209 = scalar_select %p208, %s205, 63
        %s210 = smul.addr %s209, 2
        %s211 = smul.addr %s207, 128
        %s212 = sadd.s32 %s210, %s211
        %s213 = smul.addr %s212, 4
        %s214 = scalar_lea.vmem %s0, %s213
        %p215 = pneg %p59
        %p216 = pneg %p56
        %p217 = scmp.lt.s32.totalorder %s22, 1
        %s218 = scalar_select %p217, %s22, 1
        %p219 = scmp.lt.s32.totalorder %s23, 0
        %s220 = scalar_select %p219, %s23, 0
        %s221 = smul.addr %s218, 32
        %s222 = sadd.s32 %s220, %s221
        %s223 = smul.addr %s222, 4
        %s224 = scalar_lea.vmem %s1, %s223
        %p225 = pneg %p87
        %p226 = pneg %p84
        %p227 = scmp.lt.s32.totalorder %s22, 1
        %s228 = scalar_select %p227, %s22, 1
        %p229 = scmp.lt.s32.totalorder %s23, 0
        %s230 = scalar_select %p229, %s23, 0
        %s231 = sadd.s32 %s230, %s228
        %s232 = scalar_lea.vmem %s2, %s231
        %p233 = pneg %p115
        %p234 = pneg %p112
        %p235 = pneg %p145
        %p236 = pneg %p142
        %s237 = sand.u32 %s132, 1
        %s238 = scalar_lea.sflag [#allocation3], %s237
        %s239 = sand.u32 %s132, 1
        %s240 = smul.addr %s239, 128
        %s241 = scalar_lea.vmem [#allocation2], %s240
        %s242 = smul.u32 32, %s24
        %p243 = scmp.lt.s32.totalorder %s22, 1
        %s244 = scalar_select %p243, %s22, 1
        %p245 = scmp.lt.s32.totalorder %s242, 63
        %s246 = scalar_select %p245, %s242, 63
        %s247 = smul.addr %s246, 2
        %s248 = smul.addr %s244, 128
        %s249 = sadd.s32 %s247, %s248
        %s250 = smul.addr %s249, 4
        %s251 = scalar_lea.vmem %s0, %s250
        %s252 = smul.u32 32, %s24
        %p253 = scmp.lt.s32.totalorder %s22, 1
        %s254 = scalar_select %p253, %s22, 1
        %p255 = scmp.lt.s32.totalorder %s23, 0
        %s256 = scalar_select %p255, %s23, 0
        %s257 = smul.addr %s254, 32
        %s258 = sadd.s32 %s256, %s257
        %s259 = smul.addr %s258, 4
        %s260 = scalar_lea.vmem %s1, %s259
        %p261 = scmp.lt.s32.totalorder %s22, 1
        %s262 = scalar_select %p261, %s22, 1
        %p263 = scmp.lt.s32.totalorder %s23, 0
        %s264 = scalar_select %p263, %s23, 0
        %s265 = sadd.s32 %s264, %s262
        %s266 = scalar_lea.vmem %s2, %s265
        %s267 = smul.u32 32, %s24
        %v269 = vld [vmem:[%s251] sm:$0xff]
        %v270 = vld [vmem:[%s251 + $0x8] sm:$0xff]
        %v271 = vld [vmem:[%s251 + $0x10] sm:$0xff]
        %v272 = vld [vmem:[%s251 + $0x18] sm:$0xff]
        %v273 = vld [vmem:[%s251 + $0x20] sm:$0xff]
        %v274 = vld [vmem:[%s251 + $0x28] sm:$0xff]
        %v275 = vld [vmem:[%s251 + $0x30] sm:$0xff]
        %v276 = vld [vmem:[%s251 + $0x38] sm:$0xff]
        %v277 = vld [vmem:[%s251 + $0x40] sm:$0xff]
        %v278 = vld [vmem:[%s251 + $0x48] sm:$0xff]
        %v279 = vld [vmem:[%s251 + $0x50] sm:$0xff]
        %v280 = vld [vmem:[%s251 + $0x58] sm:$0xff]
        %v281 = vld [vmem:[%s251 + $0x60] sm:$0xff]
        %v282 = vld [vmem:[%s251 + $0x68] sm:$0xff]
        %v283 = vld [vmem:[%s251 + $0x70] sm:$0xff]
        %v284 = vld [vmem:[%s251 + $0x78] sm:$0xff]
        %v285 = vld [vmem:[%s251 + $0x80] sm:$0xff]
        %v286 = vld [vmem:[%s251 + $0x88] sm:$0xff]
        %v287 = vld [vmem:[%s251 + $0x90] sm:$0xff]
        %v288 = vld [vmem:[%s251 + $0x98] sm:$0xff]
        %v289 = vld [vmem:[%s251 + $0xa0] sm:$0xff]
        %v290 = vld [vmem:[%s251 + $0xa8] sm:$0xff]
        %v291 = vld [vmem:[%s251 + $0xb0] sm:$0xff]
        %v292 = vld [vmem:[%s251 + $0xb8] sm:$0xff]
        %v293 = vld [vmem:[%s251 + $0xc0] sm:$0xff]
        %v294 = vld [vmem:[%s251 + $0xc8] sm:$0xff]
        %v295 = vld [vmem:[%s251 + $0xd0] sm:$0xff]
        %v296 = vld [vmem:[%s251 + $0xd8] sm:$0xff]
        %v297 = vld [vmem:[%s251 + $0xe0] sm:$0xff]
        %v298 = vld [vmem:[%s251 + $0xe8] sm:$0xff]
        %v299 = vld [vmem:[%s251 + $0xf0] sm:$0xff]
        %v300 = vld [vmem:[%s251 + $0xf8] sm:$0xff]
        %v301 = vld [vmem:[%s260] sm:$0xf]
        %v302 = vld [vmem:[%s260 + $0x4] sm:$0xf]
        %v303 = vld [vmem:[%s260 + $0x8] sm:$0xf]
        %v304 = vld [vmem:[%s260 + $0xc] sm:$0xf]
        %v305 = vld [vmem:[%s260 + $0x10] sm:$0xf]
        %v306 = vld [vmem:[%s260 + $0x14] sm:$0xf]
        %v307 = vld [vmem:[%s260 + $0x18] sm:$0xf]
        %v308 = vld [vmem:[%s260 + $0x1c] sm:$0xf]
        %v309 = vld [vmem:[%s260 + $0x20] sm:$0xf]
        %v310 = vld [vmem:[%s260 + $0x24] sm:$0xf]
        %v311 = vld [vmem:[%s260 + $0x28] sm:$0xf]
        %v312 = vld [vmem:[%s260 + $0x2c] sm:$0xf]
        %v313 = vld [vmem:[%s260 + $0x30] sm:$0xf]
        %v314 = vld [vmem:[%s260 + $0x34] sm:$0xf]
        %v315 = vld [vmem:[%s260 + $0x38] sm:$0xf]
        %v316 = vld [vmem:[%s260 + $0x3c] sm:$0xf]
        %v317 = vld [vmem:[%s260 + $0x40] sm:$0xf]
        %v318 = vld [vmem:[%s260 + $0x44] sm:$0xf]
        %v319 = vld [vmem:[%s260 + $0x48] sm:$0xf]
        %v320 = vld [vmem:[%s260 + $0x4c] sm:$0xf]
        %v321 = vld [vmem:[%s260 + $0x50] sm:$0xf]
        %v322 = vld [vmem:[%s260 + $0x54] sm:$0xf]
        %v323 = vld [vmem:[%s260 + $0x58] sm:$0xf]
        %v324 = vld [vmem:[%s260 + $0x5c] sm:$0xf]
        %v325 = vld [vmem:[%s260 + $0x60] sm:$0xf]
        %v326 = vld [vmem:[%s260 + $0x64] sm:$0xf]
        %v327 = vld [vmem:[%s260 + $0x68] sm:$0xf]
        %v328 = vld [vmem:[%s260 + $0x6c] sm:$0xf]
        %v329 = vld [vmem:[%s260 + $0x70] sm:$0xf]
        %v330 = vld [vmem:[%s260 + $0x74] sm:$0xf]
        %v331 = vld [vmem:[%s260 + $0x78] sm:$0xf]
        %v332 = vld [vmem:[%s260 + $0x7c] sm:$0xf]
        %v333 = vld [vmem:[%s266] sm:$0x1]
        %v335 = vlaneseq
        %v336 = vshrl.u32 %v335, 7
        %v337 = vsub.s32 0, %v336
        %v338 = vrot.slane %v333, %v337
        %v372 = vunpack.c.l.b16 %v269
        %v373 = vunpack.c.h.b16 %v269
        %v374 = vunpack.c.l.b16 %v270
        %v375 = vunpack.c.h.b16 %v270
        %v376 = vunpack.c.l.b16 %v271
        %v377 = vunpack.c.h.b16 %v271
        %v378 = vunpack.c.l.b16 %v272
        %v379 = vunpack.c.h.b16 %v272
        %v380 = vunpack.c.l.b16 %v273
        %v381 = vunpack.c.h.b16 %v273
        %v382 = vunpack.c.l.b16 %v274
        %v383 = vunpack.c.h.b16 %v274
        %v384 = vunpack.c.l.b16 %v275
        %v385 = vunpack.c.h.b16 %v275
        %v386 = vunpack.c.l.b16 %v276
        %v387 = vunpack.c.h.b16 %v276
        %v388 = vunpack.c.l.b16 %v277
        %v389 = vunpack.c.h.b16 %v277
        %v390 = vunpack.c.l.b16 %v278
        %v391 = vunpack.c.h.b16 %v278
        %v392 = vunpack.c.l.b16 %v279
        %v393 = vunpack.c.h.b16 %v279
        %v394 = vunpack.c.l.b16 %v280
        %v395 = vunpack.c.h.b16 %v280
        %v396 = vunpack.c.l.b16 %v281
        %v397 = vunpack.c.h.b16 %v281
        %v398 = vunpack.c.l.b16 %v282
        %v399 = vunpack.c.h.b16 %v282
        %v400 = vunpack.c.l.b16 %v283
        %v401 = vunpack.c.h.b16 %v283
        %v402 = vunpack.c.l.b16 %v284
        %v403 = vunpack.c.h.b16 %v284
        %v404 = vunpack.c.l.b16 %v285
        %v405 = vunpack.c.h.b16 %v285
        %v406 = vunpack.c.l.b16 %v286
        %v407 = vunpack.c.h.b16 %v286
        %v408 = vunpack.c.l.b16 %v287
        %v409 = vunpack.c.h.b16 %v287
        %v410 = vunpack.c.l.b16 %v288
        %v411 = vunpack.c.h.b16 %v288
        %v412 = vunpack.c.l.b16 %v289
        %v413 = vunpack.c.h.b16 %v289
        %v414 = vunpack.c.l.b16 %v290
        %v415 = vunpack.c.h.b16 %v290
        %v416 = vunpack.c.l.b16 %v291
        %v417 = vunpack.c.h.b16 %v291
        %v418 = vunpack.c.l.b16 %v292
        %v419 = vunpack.c.h.b16 %v292
        %v420 = vunpack.c.l.b16 %v293
        %v421 = vunpack.c.h.b16 %v293
        %v422 = vunpack.c.l.b16 %v294
        %v423 = vunpack.c.h.b16 %v294
        %v424 = vunpack.c.l.b16 %v295
        %v425 = vunpack.c.h.b16 %v295
        %v426 = vunpack.c.l.b16 %v296
        %v427 = vunpack.c.h.b16 %v296
        %v428 = vunpack.c.l.b16 %v297
        %v429 = vunpack.c.h.b16 %v297
        %v430 = vunpack.c.l.b16 %v298
        %v431 = vunpack.c.h.b16 %v298
        %v432 = vunpack.c.l.b16 %v299
        %v433 = vunpack.c.h.b16 %v299
        %v434 = vunpack.c.l.b16 %v300
        %v435 = vunpack.c.h.b16 %v300
        %v436 = vpack.c.b16 %v374, %v372
        %v437 = vpack.c.b16 %v375, %v373
        %v438 = vpack.c.b16 %v378, %v376
        %v439 = vpack.c.b16 %v379, %v377
        %v440 = vpack.c.b16 %v382, %v380
        %v441 = vpack.c.b16 %v383, %v381
        %v442 = vpack.c.b16 %v386, %v384
        %v443 = vpack.c.b16 %v387, %v385
        %v444 = vpack.c.b16 %v390, %v388
        %v445 = vpack.c.b16 %v391, %v389
        %v446 = vpack.c.b16 %v394, %v392
        %v447 = vpack.c.b16 %v395, %v393
        %v448 = vpack.c.b16 %v398, %v396
        %v449 = vpack.c.b16 %v399, %v397
        %v450 = vpack.c.b16 %v402, %v400
        %v451 = vpack.c.b16 %v403, %v401
        %v452 = vpack.c.b16 %v406, %v404
        %v453 = vpack.c.b16 %v407, %v405
        %v454 = vpack.c.b16 %v410, %v408
        %v455 = vpack.c.b16 %v411, %v409
        %v456 = vpack.c.b16 %v414, %v412
        %v457 = vpack.c.b16 %v415, %v413
        %v458 = vpack.c.b16 %v418, %v416
        %v459 = vpack.c.b16 %v419, %v417
        %v460 = vpack.c.b16 %v422, %v420
        %v461 = vpack.c.b16 %v423, %v421
        %v462 = vpack.c.b16 %v426, %v424
        %v463 = vpack.c.b16 %v427, %v425
        %v464 = vpack.c.b16 %v430, %v428
        %v465 = vpack.c.b16 %v431, %v429
        %v466 = vpack.c.b16 %v434, %v432
        %v467 = vpack.c.b16 %v435, %v433
        %v532 = vunpack.c.l.b16 %v301
        %v533 = vunpack.c.l.b16 %v302
        %v534 = vunpack.c.l.b16 %v303
        %v535 = vunpack.c.l.b16 %v304
        %v536 = vunpack.c.l.b16 %v305
        %v537 = vunpack.c.l.b16 %v306
        %v538 = vunpack.c.l.b16 %v307
        %v539 = vunpack.c.l.b16 %v308
        %v540 = vunpack.c.l.b16 %v309
        %v541 = vunpack.c.l.b16 %v310
        %v542 = vunpack.c.l.b16 %v311
        %v543 = vunpack.c.l.b16 %v312
        %v544 = vunpack.c.l.b16 %v313
        %v545 = vunpack.c.l.b16 %v314
        %v546 = vunpack.c.l.b16 %v315
        %v547 = vunpack.c.l.b16 %v316
        %v548 = vunpack.c.l.b16 %v317
        %v549 = vunpack.c.l.b16 %v318
        %v550 = vunpack.c.l.b16 %v319
        %v551 = vunpack.c.l.b16 %v320
        %v552 = vunpack.c.l.b16 %v321
        %v553 = vunpack.c.l.b16 %v322
        %v554 = vunpack.c.l.b16 %v323
        %v555 = vunpack.c.l.b16 %v324
        %v556 = vunpack.c.l.b16 %v325
        %v557 = vunpack.c.l.b16 %v326
        %v558 = vunpack.c.l.b16 %v327
        %v559 = vunpack.c.l.b16 %v328
        %v560 = vunpack.c.l.b16 %v329
        %v561 = vunpack.c.l.b16 %v330
        %v562 = vunpack.c.l.b16 %v331
        %v563 = vunpack.c.l.b16 %v332
        %v564 = vpack.c.b16 %v533, %v532
        %v565 = vpack.c.b16 %v535, %v534
        %v566 = vpack.c.b16 %v537, %v536
        %v567 = vpack.c.b16 %v539, %v538
        %v568 = vpack.c.b16 %v541, %v540
        %v569 = vpack.c.b16 %v543, %v542
        %v570 = vpack.c.b16 %v545, %v544
        %v571 = vpack.c.b16 %v547, %v546
        %v572 = vpack.c.b16 %v549, %v548
        %v573 = vpack.c.b16 %v551, %v550
        %v574 = vpack.c.b16 %v553, %v552
        %v575 = vpack.c.b16 %v555, %v554
        %v576 = vpack.c.b16 %v557, %v556
        %v577 = vpack.c.b16 %v559, %v558
        %v578 = vpack.c.b16 %v561, %v560
        %v579 = vpack.c.b16 %v563, %v562
        %596 = vmatprep.subr.bf16.mxu0 0
        %597 = vmatpush1.bf16.msra.mxu0 %v564
        %598 = vmatprep.subr.bf16.mxu0 0
        %599 = vmatpush1.bf16.msra.mxu0 %v565
        %600 = vmatprep.subr.bf16.mxu0 0
        %601 = vmatpush1.bf16.msra.mxu0 %v566
        %602 = vmatprep.subr.bf16.mxu0 0
        %603 = vmatpush1.bf16.msra.mxu0 %v567
        %604 = vmatprep.subr.bf16.mxu0 0
        %605 = vmatpush1.bf16.msra.mxu0 %v568
        %606 = vmatprep.subr.bf16.mxu0 0
        %607 = vmatpush1.bf16.msra.mxu0 %v569
        %608 = vmatprep.subr.bf16.mxu0 0
        %609 = vmatpush1.bf16.msra.mxu0 %v570
        %610 = vmatprep.subr.bf16.mxu0 0
        %611 = vmatpush1.bf16.msra.mxu0 %v571
        %612 = vmatprep.subr.bf16.mxu0 0
        %613 = vmatpush1.bf16.msra.mxu0 %v572
        %614 = vmatprep.subr.bf16.mxu0 0
        %615 = vmatpush1.bf16.msra.mxu0 %v573
        %616 = vmatprep.subr.bf16.mxu0 0
        %617 = vmatpush1.bf16.msra.mxu0 %v574
        %618 = vmatprep.subr.bf16.mxu0 0
        %619 = vmatpush1.bf16.msra.mxu0 %v575
        %620 = vmatprep.subr.bf16.mxu0 0
        %621 = vmatpush1.bf16.msra.mxu0 %v576
        %622 = vmatprep.subr.bf16.mxu0 0
        %623 = vmatpush1.bf16.msra.mxu0 %v577
        %624 = vmatprep.subr.bf16.mxu0 0
        %625 = vmatpush1.bf16.msra.mxu0 %v578
        %626 = vmatprep.subr.bf16.mxu0 0
        %627 = vmatpush1.bf16.msra.mxu0 %v579
        %628 = vmatprep.mubr.bf16.mxu0 %v437
        %629 = vmatmul.mubr.bf16.gmra.mrb[0].mxu0 %v436
        %v630 = vpop.f32.mrb[0].mxu0
        %v631 = vadd.f32 %v338, %v630
        %v632 = vpop.f32.mrb[0].mxu0
        %v633 = vpop.f32.mrb[0].mxu0
        %v634 = vadd.f32 %v338, %v633
        %v635 = vpop.f32.mrb[0].mxu0
        %636 = vmatprep.mubr.bf16.mxu0 %v439
        %637 = vmatmul.mubr.bf16.gmra.mrb[0].mxu0 %v438
        %v638 = vpop.f32.mrb[0].mxu0
        %v639 = vadd.f32 %v338, %v638
        %v640 = vpop.f32.mrb[0].mxu0
        %v641 = vpop.f32.mrb[0].mxu0
        %v642 = vadd.f32 %v338, %v641
        %v643 = vpop.f32.mrb[0].mxu0
        %644 = vmatprep.mubr.bf16.mxu0 %v441
        %645 = vmatmul.mubr.bf16.gmra.mrb[0].mxu0 %v440
        %v646 = vpop.f32.mrb[0].mxu0
        %v647 = vadd.f32 %v338, %v646
        %v648 = vpop.f32.mrb[0].mxu0
        %v649 = vpop.f32.mrb[0].mxu0
        %v650 = vadd.f32 %v338, %v649
        %v651 = vpop.f32.mrb[0].mxu0
        %652 = vmatprep.mubr.bf16.mxu0 %v443
        %653 = vmatmul.mubr.bf16.gmra.mrb[0].mxu0 %v442
        %v654 = vpop.f32.mrb[0].mxu0
        %v655 = vadd.f32 %v338, %v654
        %v656 = vpop.f32.mrb[0].mxu0
        %v657 = vpop.f32.mrb[0].mxu0
        %v658 = vadd.f32 %v338, %v657
        %v659 = vpop.f32.mrb[0].mxu0
        %660 = vmatprep.mubr.bf16.mxu0 %v445
        %661 = vmatmul.mubr.bf16.gmra.mrb[0].mxu0 %v444
        %v662 = vpop.f32.mrb[0].mxu0
        %v663 = vadd.f32 %v338, %v662
        %v664 = vpop.f32.mrb[0].mxu0
        %v665 = vpop.f32.mrb[0].mxu0
        %v666 = vadd.f32 %v338, %v665
        %v667 = vpop.f32.mrb[0].mxu0
        %668 = vmatprep.mubr.bf16.mxu0 %v447
        %669 = vmatmul.mubr.bf16.gmra.mrb[0].mxu0 %v446
        %v670 = vpop.f32.mrb[0].mxu0
        %v671 = vadd.f32 %v338, %v670
        %v672 = vpop.f32.mrb[0].mxu0
        %v673 = vpop.f32.mrb[0].mxu0
        %v674 = vadd.f32 %v338, %v673
        %v675 = vpop.f32.mrb[0].mxu0
        %676 = vmatprep.mubr.bf16.mxu0 %v449
        %677 = vmatmul.mubr.bf16.gmra.mrb[0].mxu0 %v448
        %v678 = vpop.f32.mrb[0].mxu0
        %v679 = vadd.f32 %v338, %v678
        %v680 = vpop.f32.mrb[0].mxu0
        %v681 = vpop.f32.mrb[0].mxu0
        %v682 = vadd.f32 %v338, %v681
        %v683 = vpop.f32.mrb[0].mxu0
        %684 = vmatprep.mubr.bf16.mxu0 %v451
        %685 = vmatmul.mubr.bf16.gmra.mrb[0].mxu0 %v450
        %v686 = vpop.f32.mrb[0].mxu0
        %v687 = vadd.f32 %v338, %v686
        %v688 = vpop.f32.mrb[0].mxu0
        %v689 = vpop.f32.mrb[0].mxu0
        %v690 = vadd.f32 %v338, %v689
        %v691 = vpop.f32.mrb[0].mxu0
        %692 = vmatprep.mubr.bf16.mxu0 %v453
        %693 = vmatmul.mubr.bf16.gmra.mrb[0].mxu0 %v452
        %v694 = vpop.f32.mrb[0].mxu0
        %v695 = vadd.f32 %v338, %v694
        %v696 = vpop.f32.mrb[0].mxu0
        %v697 = vpop.f32.mrb[0].mxu0
        %v698 = vadd.f32 %v338, %v697
        %v699 = vpop.f32.mrb[0].mxu0
        %700 = vmatprep.mubr.bf16.mxu0 %v455
        %701 = vmatmul.mubr.bf16.gmra.mrb[0].mxu0 %v454
        %v702 = vpop.f32.mrb[0].mxu0
        %v703 = vadd.f32 %v338, %v702
        %v704 = vpop.f32.mrb[0].mxu0
        %v705 = vpop.f32.mrb[0].mxu0
        %v706 = vadd.f32 %v338, %v705
        %v707 = vpop.f32.mrb[0].mxu0
        %708 = vmatprep.mubr.bf16.mxu0 %v457
        %709 = vmatmul.mubr.bf16.gmra.mrb[0].mxu0 %v456
        %v710 = vpop.f32.mrb[0].mxu0
        %v711 = vadd.f32 %v338, %v710
        %v712 = vpop.f32.mrb[0].mxu0
        %v713 = vpop.f32.mrb[0].mxu0
        %v714 = vadd.f32 %v338, %v713
        %v715 = vpop.f32.mrb[0].mxu0
        %716 = vmatprep.mubr.bf16.mxu0 %v459
        %717 = vmatmul.mubr.bf16.gmra.mrb[0].mxu0 %v458
        %v718 = vpop.f32.mrb[0].mxu0
        %v719 = vadd.f32 %v338, %v718
        %v720 = vpop.f32.mrb[0].mxu0
        %v721 = vpop.f32.mrb[0].mxu0
        %v722 = vadd.f32 %v338, %v721
        %v723 = vpop.f32.mrb[0].mxu0
        %724 = vmatprep.mubr.bf16.mxu0 %v461
        %725 = vmatmul.mubr.bf16.gmra.mrb[0].mxu0 %v460
        %v726 = vpop.f32.mrb[0].mxu0
        %v727 = vadd.f32 %v338, %v726
        %v728 = vpop.f32.mrb[0].mxu0
        %v729 = vpop.f32.mrb[0].mxu0
        %v730 = vadd.f32 %v338, %v729
        %v731 = vpop.f32.mrb[0].mxu0
        %732 = vmatprep.mubr.bf16.mxu0 %v463
        %733 = vmatmul.mubr.bf16.gmra.mrb[0].mxu0 %v462
        %v734 = vpop.f32.mrb[0].mxu0
        %v735 = vadd.f32 %v338, %v734
        %v736 = vpop.f32.mrb[0].mxu0
        %v737 = vpop.f32.mrb[0].mxu0
        %v738 = vadd.f32 %v338, %v737
        %v739 = vpop.f32.mrb[0].mxu0
        %740 = vmatprep.mubr.bf16.mxu0 %v465
        %741 = vmatmul.mubr.bf16.gmra.mrb[0].mxu0 %v464
        %v742 = vpop.f32.mrb[0].mxu0
        %v743 = vadd.f32 %v338, %v742
        %v744 = vpop.f32.mrb[0].mxu0
        %v745 = vpop.f32.mrb[0].mxu0
        %v746 = vadd.f32 %v338, %v745
        %v747 = vpop.f32.mrb[0].mxu0
        %748 = vmatprep.mubr.bf16.mxu0 %v467
        %749 = vmatmul.mubr.bf16.gmra.mrb[0].mxu0 %v466
        %v750 = vpop.f32.mrb[0].mxu0
        %v751 = vadd.f32 %v338, %v750
        %v752 = vpop.f32.mrb[0].mxu0
        %v753 = vpop.f32.mrb[0].mxu0
        %v754 = vadd.f32 %v338, %v753
        %v755 = vpop.f32.mrb[0].mxu0
        %756 = vdwg.mxu0
        %v757 = vmax.f32 %v631, 0.0
        %v758 = vmax.f32 %v634, 0.0
        %v759 = vmax.f32 %v639, 0.0
        %v760 = vmax.f32 %v642, 0.0
        %v761 = vmax.f32 %v647, 0.0
        %v762 = vmax.f32 %v650, 0.0
        %v763 = vmax.f32 %v655, 0.0
        %v764 = vmax.f32 %v658, 0.0
        %v765 = vmax.f32 %v663, 0.0
        %v766 = vmax.f32 %v666, 0.0
        %v767 = vmax.f32 %v671, 0.0
        %v768 = vmax.f32 %v674, 0.0
        %v769 = vmax.f32 %v679, 0.0
        %v770 = vmax.f32 %v682, 0.0
        %v771 = vmax.f32 %v687, 0.0
        %v772 = vmax.f32 %v690, 0.0
        %v773 = vmax.f32 %v695, 0.0
        %v774 = vmax.f32 %v698, 0.0
        %v775 = vmax.f32 %v703, 0.0
        %v776 = vmax.f32 %v706, 0.0
        %v777 = vmax.f32 %v711, 0.0
        %v778 = vmax.f32 %v714, 0.0
        %v779 = vmax.f32 %v719, 0.0
        %v780 = vmax.f32 %v722, 0.0
        %v781 = vmax.f32 %v727, 0.0
        %v782 = vmax.f32 %v730, 0.0
        %v783 = vmax.f32 %v735, 0.0
        %v784 = vmax.f32 %v738, 0.0
        %v785 = vmax.f32 %v743, 0.0
        %v786 = vmax.f32 %v746, 0.0
        %v787 = vmax.f32 %v751, 0.0
        %v788 = vmax.f32 %v754, 0.0
        %v789 = vpack.c.bf16 %v758, %v757
        %v790 = vpack.c.bf16 %v760, %v759
        %v791 = vpack.c.bf16 %v762, %v761
        %v792 = vpack.c.bf16 %v764, %v763
        %v793 = vpack.c.bf16 %v766, %v765
        %v794 = vpack.c.bf16 %v768, %v767
        %v795 = vpack.c.bf16 %v770, %v769
        %v796 = vpack.c.bf16 %v772, %v771
        %v797 = vpack.c.bf16 %v774, %v773
        %v798 = vpack.c.bf16 %v776, %v775
        %v799 = vpack.c.bf16 %v778, %v777
        %v800 = vpack.c.bf16 %v780, %v779
        %v801 = vpack.c.bf16 %v782, %v781
        %v802 = vpack.c.bf16 %v784, %v783
        %v803 = vpack.c.bf16 %v786, %v785
        %v804 = vpack.c.bf16 %v788, %v787
        %v821 = vunpack.c.l.b16 %v789
        %v822 = vunpack.c.h.b16 %v789
        %v823 = vunpack.c.l.b16 %v790
        %v824 = vunpack.c.h.b16 %v790
        %v825 = vunpack.c.l.b16 %v791
        %v826 = vunpack.c.h.b16 %v791
        %v827 = vunpack.c.l.b16 %v792
        %v828 = vunpack.c.h.b16 %v792
        %v829 = vunpack.c.l.b16 %v793
        %v830 = vunpack.c.h.b16 %v793
        %v831 = vunpack.c.l.b16 %v794
        %v832 = vunpack.c.h.b16 %v794
        %v833 = vunpack.c.l.b16 %v795
        %v834 = vunpack.c.h.b16 %v795
        %v835 = vunpack.c.l.b16 %v796
        %v836 = vunpack.c.h.b16 %v796
        %v837 = vunpack.c.l.b16 %v797
        %v838 = vunpack.c.h.b16 %v797
        %v839 = vunpack.c.l.b16 %v798
        %v840 = vunpack.c.h.b16 %v798
        %v841 = vunpack.c.l.b16 %v799
        %v842 = vunpack.c.h.b16 %v799
        %v843 = vunpack.c.l.b16 %v800
        %v844 = vunpack.c.h.b16 %v800
        %v845 = vunpack.c.l.b16 %v801
        %v846 = vunpack.c.h.b16 %v801
        %v847 = vunpack.c.l.b16 %v802
        %v848 = vunpack.c.h.b16 %v802
        %v849 = vunpack.c.l.b16 %v803
        %v850 = vunpack.c.h.b16 %v803
        %v851 = vunpack.c.l.b16 %v804
        %v852 = vunpack.c.h.b16 %v804
        %v853 = vpack.c.b16 %v821, %v821
        %v854 = vpack.c.b16 %v822, %v822
        %v855 = vpack.c.b16 %v823, %v823
        %v856 = vpack.c.b16 %v824, %v824
        %v857 = vpack.c.b16 %v825, %v825
        %v858 = vpack.c.b16 %v826, %v826
        %v859 = vpack.c.b16 %v827, %v827
        %v860 = vpack.c.b16 %v828, %v828
        %v861 = vpack.c.b16 %v829, %v829
        %v862 = vpack.c.b16 %v830, %v830
        %v863 = vpack.c.b16 %v831, %v831
        %v864 = vpack.c.b16 %v832, %v832
        %v865 = vpack.c.b16 %v833, %v833
        %v866 = vpack.c.b16 %v834, %v834
        %v867 = vpack.c.b16 %v835, %v835
        %v868 = vpack.c.b16 %v836, %v836
        %v869 = vpack.c.b16 %v837, %v837
        %v870 = vpack.c.b16 %v838, %v838
        %v871 = vpack.c.b16 %v839, %v839
        %v872 = vpack.c.b16 %v840, %v840
        %v873 = vpack.c.b16 %v841, %v841
        %v874 = vpack.c.b16 %v842, %v842
        %v875 = vpack.c.b16 %v843, %v843
        %v876 = vpack.c.b16 %v844, %v844
        %v877 = vpack.c.b16 %v845, %v845
        %v878 = vpack.c.b16 %v846, %v846
        %v879 = vpack.c.b16 %v847, %v847
        %v880 = vpack.c.b16 %v848, %v848
        %v881 = vpack.c.b16 %v849, %v849
        %v882 = vpack.c.b16 %v850, %v850
        %v883 = vpack.c.b16 %v851, %v851
        %v884 = vpack.c.b16 %v852, %v852
        %917 = vst [vmem:[%s241] sm:$0xf] %v853
        %918 = vst [vmem:[%s241 + $0x4] sm:$0xf] %v854
        %919 = vst [vmem:[%s241 + $0x8] sm:$0xf] %v855
        %920 = vst [vmem:[%s241 + $0xc] sm:$0xf] %v856
        %921 = vst [vmem:[%s241 + $0x10] sm:$0xf] %v857
        %922 = vst [vmem:[%s241 + $0x14] sm:$0xf] %v858
        %923 = vst [vmem:[%s241 + $0x18] sm:$0xf] %v859
        %924 = vst [vmem:[%s241 + $0x1c] sm:$0xf] %v860
        %925 = vst [vmem:[%s241 + $0x20] sm:$0xf] %v861
        %926 = vst [vmem:[%s241 + $0x24] sm:$0xf] %v862
        %927 = vst [vmem:[%s241 + $0x28] sm:$0xf] %v863
        %928 = vst [vmem:[%s241 + $0x2c] sm:$0xf] %v864
        %929 = vst [vmem:[%s241 + $0x30] sm:$0xf] %v865
        %930 = vst [vmem:[%s241 + $0x34] sm:$0xf] %v866
        %931 = vst [vmem:[%s241 + $0x38] sm:$0xf] %v867
        %932 = vst [vmem:[%s241 + $0x3c] sm:$0xf] %v868
        %933 = vst [vmem:[%s241 + $0x40] sm:$0xf] %v869
        %934 = vst [vmem:[%s241 + $0x44] sm:$0xf] %v870
        %935 = vst [vmem:[%s241 + $0x48] sm:$0xf] %v871
        %936 = vst [vmem:[%s241 + $0x4c] sm:$0xf] %v872
        %937 = vst [vmem:[%s241 + $0x50] sm:$0xf] %v873
        %938 = vst [vmem:[%s241 + $0x54] sm:$0xf] %v874
        %939 = vst [vmem:[%s241 + $0x58] sm:$0xf] %v875
        %940 = vst [vmem:[%s241 + $0x5c] sm:$0xf] %v876
        %941 = vst [vmem:[%s241 + $0x60] sm:$0xf] %v877
        %942 = vst [vmem:[%s241 + $0x64] sm:$0xf] %v878
        %943 = vst [vmem:[%s241 + $0x68] sm:$0xf] %v879
        %944 = vst [vmem:[%s241 + $0x6c] sm:$0xf] %v880
        %945 = vst [vmem:[%s241 + $0x70] sm:$0xf] %v881
        %946 = vst [vmem:[%s241 + $0x74] sm:$0xf] %v882
        %947 = vst [vmem:[%s241 + $0x78] sm:$0xf] %v883
        %948 = vst [vmem:[%s241 + $0x7c] sm:$0xf] %v884
        %s949 = sand.u32 %s132, 1
        %s950 = scalar_lea.sflag [#allocation3], %s949
        %s951 = sand.u32 %s132, 1
        %s952 = smul.addr %s951, 128
        %s953 = scalar_lea.vmem [#allocation2], %s952
        // Predicated region
        $region33: #{matmul_bias_act.1} parent=31 // pred_check
          %p954 = pneg %p142
        $region34: #{matmul_bias_act.1} parent=31 // pred_check_branch
          %956 = sbr.rel (%p954) target = $region36
        $region35: #{matmul_bias_act.1} parent=31 // pred_region
          %s957 = smul.u32 32, %s24
          %s959 = ssub.s32 2048, 2048
          %960 = vsyncadd %s950, %s959
          %s961 = sadd.s32 %s23, %s957
          %s962 = smul.addr %s22, 64
          %s963 = sadd.s32 %s961, %s962
          %s964 = smul.addr %s963, 64
          %s965 = scalar_lea.hbm %s3, %s964
          %s966 = sshll.u32 %s953, 4
          %s967 = int_to_ptr.vmem [resolvable:$true] %s966
          %972 = dma.vmem_to_hbm [thread:$0]  %s967, 2048, %s965, %s950, 64, 64, 4
        $region36: #{matmul_bias_act.1} parent=31 // pred_fallthru
          _
      $region32: #{matmul_bias_act.1} parent=5 // pred_fallthru
        _
      %p973 = scmp.le.s32.totalorder 2, %s12
      // Predicated region
      $region37: #{matmul_bias_act.1} parent=5 // pred_check
        %p974 = pneg %p973
      $region38: #{matmul_bias_act.1} parent=5 // pred_check_branch
        %976 = sbr.rel (%p974) target = $region40
      $region39: #{matmul_bias_act.1} parent=5 // pred_region
        %s977 = ssub.s32 %s12, 2
        // Predicated region
        $region41: #{matmul_bias_act.1} parent=39 // pred_check
          %p978 = pneg %p148
        $region42: #{matmul_bias_act.1} parent=39 // pred_check_branch
          %980 = sbr.rel (%p978) target = $region44
        $region43: #{matmul_bias_act.1} parent=39 // pred_region
          %s981 = sand.u32 %s133, 1
          %s982 = scalar_lea.sflag [#allocation3], %s981
          %s983 = sand.u32 %s133, 1
          %s984 = smul.addr %s983, 128
          %s985 = scalar_lea.vmem [#allocation2], %s984
          %986 = dma.done %s982, 2048
        $region44: #{matmul_bias_act.1} parent=39 // pred_fallthru
          _
      $region40: #{matmul_bias_act.1} parent=5 // pred_fallthru
        _
    $region6: #{matmul_bias_act.1} parent=1 // loop_footer
      %s16 = sadd.s32 1, %s12
    $region7: #{matmul_bias_act.1} parent=1 // loop_footer_branch
      %11 = sbr.rel target = $region3
    $region8: #{matmul_bias_act.1} parent=1 // loop_exit
      _
    %987 = vsyncpa [#allocation3], 1
    %s988 = scalar_lea.sflag [#allocation3], 1
    %989 = vsyncpa %s988, 1

</llo_original>
